<compile_context>
chip_gen: v5e
topology: v5e:2x2
jax: 0.10.0
libtpu: 0.0.40
codegen_flags: <defaults>
</compile_context>

<pallas_src>
import jax
import jax.numpy as jnp
from jax import lax
from jax.experimental import pallas as pl
from jax.experimental.pallas import tpu as pltpu


def _ensemble_kernel(xT_ref, w1t_ref, b1_ref, w2t_ref, b2_ref, mu_ref, unc_ref):
    """One batch tile of the fused ensemble forward (batch on the lane axis).

    xT_ref  : (D, TN)    bf16  transposed batch tile (batch on lanes)
    w1t_ref : (M*H, D)   bf16  all members' layer-1 weights, transposed
    b1_ref  : (M*H, 1)   f32
    w2t_ref : (M, M*H)   f32   block-diagonal layer-2 weights
    b2_ref  : (M, 1)     f32
    mu_ref  : (1, TN)    f32   lane-dense outputs
    unc_ref : (1, TN)    f32
    """
    # Layer 1 for all M members in one full-width MXU pass: (M*H, TN).
    # bf16 x bf16 operands, f32 accumulation.
    h = jnp.dot(w1t_ref[...], xT_ref[...], preferred_element_type=jnp.float32)
    h = jnp.maximum(h + b1_ref[...], 0.0)                       # f32 VPU math

    # Layer 2 for all members at once: (M, M*H) @ (M*H, TN) -> (M, TN).
    # Standard contraction, batch stays on lanes; weights are tiny, kept f32.
    outs = jnp.dot(w2t_ref[...], h,
                   preferred_element_type=jnp.float32) + b2_ref[...]   # (M, TN)

    m = jnp.float32(outs.shape[0])
    mean = jnp.sum(outs, axis=0, keepdims=True) / m             # (1, TN)
    dev = outs - mean
    # Unbiased variance (torch.var default, ddof=1), two-pass form to avoid
    # sumsq - n*mean^2 cancellation; M == 1 degenerate case clamped to 0.
    denom = jnp.maximum(m - 1.0, 1.0)
    var = jnp.sum(dev * dev, axis=0, keepdims=True) / denom     # (1, TN)

    mu_ref[...] = mean.astype(mu_ref.dtype)
    unc_ref[...] = var.astype(unc_ref.dtype)


def _pick_tile_n(n, tile_n_max=1024):
    """Batch tile: multiple of 128, <= tile_n_max, aiming for >= 4 grid steps."""
    n128 = pl.cdiv(n, 128) * 128
    quarter = (n128 // 4) // 128 * 128
    return max(128, min(tile_n_max, quarter))


def ensemble_forward(x, w1, b1, w2, b2, *, tile_n=None):
    """x: (N, D); w1: (M, D, H); b1: (M, H); w2: (M, H, 1); b2: (M, 1).

    Returns (mu, unc): mu (N, 1) = mean over members, unc (N,) = unbiased var.
    """
    N, D = x.shape
    M, _, H = w1.shape
    MH = M * H
    # NOTE(v6e/v7x): if the real ensemble has larger M*H, pad the fused width
    # to a multiple of 256 here for full MXU column utilization; MH=128 is
    # already a perfect fit for v5e's 128x128 MXU and the kernel is HBM-bound
    # anyway at these shapes.

    # ---- Wrapper-side member fusion / layout plumbing (done once) ---------
    # Layer 1: members side by side, transposed so the kernel contracts
    # (MH, D) @ (D, TN) with the batch on the lane axis.  bf16 MXU operands.
    w1_all = jnp.transpose(w1, (1, 0, 2)).reshape(D, MH)        # (D, M*H)
    w1t = w1_all.T.astype(jnp.bfloat16)                         # (M*H, D)
    b1_col = b1.reshape(MH, 1).astype(jnp.float32)              # (M*H, 1)
    # Layer 2: block-diagonal weights; row m holds W2[m,:,0] in cols m*H:(m+1)*H.
    w2_sq = w2[:, :, 0]                                         # (M, H)
    w2t = (jnp.eye(M, dtype=jnp.float32)[:, :, None]
           * w2_sq[None, :, :].astype(jnp.float32)).reshape(M, MH)   # (M, M*H)
    b2_col = b2.reshape(M, 1).astype(jnp.float32)               # (M, 1)

    # Transposed, bf16 batch (batch on lanes), padded to a multiple of tile_n.
    if tile_n is None:
        tile_n = _pick_tile_n(N)
    tn = tile_n
    xT = x.astype(jnp.bfloat16).T                               # (D, N)
    n_pad = (-N) % tn
    if n_pad:
        xT = jnp.pad(xT, ((0, 0), (0, n_pad)))
    n_padded = N + n_pad
    grid_n = n_padded // tn

    cost = pl.CostEstimate(
        flops=2 * n_padded * D * MH + 2 * n_padded * MH * M,
        transcendentals=0,
        bytes_accessed=(2 * n_padded * D            # bf16 x
                        + 2 * MH * D                # bf16 W1
                        + 4 * (MH + M * MH + M)     # f32 biases + W2
                        + 4 * 2 * n_padded),        # f32 mu + unc
    )

    mu2d, unc2d = pl.pallas_call(
        _ensemble_kernel,
        out_shape=(
            jax.ShapeDtypeStruct((1, n_padded), jnp.float32),
            jax.ShapeDtypeStruct((1, n_padded), jnp.float32),
        ),
        grid_spec=pltpu.PrefetchScalarGridSpec(
            num_scalar_prefetch=0,
            grid=(grid_n,),
            in_specs=[
                pl.BlockSpec((D, tn), lambda i: (0, i)),    # x^T batch tile
                pl.BlockSpec((MH, D), lambda i: (0, 0)),    # fused W1^T (bf16)
                pl.BlockSpec((MH, 1), lambda i: (0, 0)),    # fused b1
                pl.BlockSpec((M, MH), lambda i: (0, 0)),    # block-diag W2
                pl.BlockSpec((M, 1), lambda i: (0, 0)),     # b2
            ],
            out_specs=[
                pl.BlockSpec((1, tn), lambda i: (0, i)),    # mu  (lane-dense)
                pl.BlockSpec((1, tn), lambda i: (0, i)),    # unc (lane-dense)
            ],
        ),
        compiler_params=pltpu.CompilerParams(
            dimension_semantics=("parallel",),   # independent batch tiles
        ),
        cost_estimate=cost,
    )(xT, w1t, b1_col, w2t, b2_col)

    mu = mu2d[0, :N].reshape(N, 1)
    unc = unc2d[0, :N]
    return mu, unc


def _reference(x, w1, b1, w2, b2):
    # Pure-JAX reference of the ensemble forward + Gaussian merge, matching the
    # kernel's numerics: bf16 layer-1 MXU operands, f32 accumulation/everything else.
    hp = jax.lax.Precision.HIGHEST
    xb = x.astype(jnp.bfloat16).astype(jnp.float32)
    w1b = w1.astype(jnp.bfloat16).astype(jnp.float32)
    h = jnp.maximum(
        jnp.einsum('nd,mdh->mnh', xb, w1b, precision=hp) + b1[:, None, :], 0.0)
    outs = jnp.einsum('mnh,mho->mno', h, w2.astype(jnp.float32),
                      precision=hp) + b2[:, None, :]
    mu = outs.mean(axis=0)                                       # (N, 1)
    unc = outs.var(axis=0, ddof=1)[:, 0]                         # (N,)
    return mu, unc


if __name__ == "__main__":
    # Small shapes: M ensemble members, batch N, input dim D, hidden H.
    # M * H = 128 -> the fused layer-1 matmul is exactly one full lane width.
    M, N, D, H = 4, 256, 32, 32

    key = jax.random.PRNGKey(0)
    kx, kw1, kb1, kw2, kb2 = jax.random.split(key, 5)
    x = jax.random.normal(kx, (N, D), dtype=jnp.float32)
    w1 = jax.random.normal(kw1, (M, D, H), dtype=jnp.float32) * 0.1
    b1 = jax.random.normal(kb1, (M, H), dtype=jnp.float32) * 0.1
    w2 = jax.random.normal(kw2, (M, H, 1), dtype=jnp.float32) * 0.1
    b2 = jax.random.normal(kb2, (M, 1), dtype=jnp.float32) * 0.1

    mu, unc = ensemble_forward(x, w1, b1, w2, b2)
    jax.block_until_ready((mu, unc))

    mu_ref, unc_ref = _reference(x, w1, b1, w2, b2)
    assert mu.shape == (N, 1) and unc.shape == (N,)
    assert jnp.allclose(mu, mu_ref, atol=5e-4, rtol=1e-3), \
        float(jnp.max(jnp.abs(mu - mu_ref)))
    assert jnp.allclose(unc, unc_ref, atol=5e-4, rtol=1e-3), \
        float(jnp.max(jnp.abs(unc - unc_ref)))

    print("KERNEL_OK")
</pallas_src>

<mosaic_0001>
module attributes {stable_mosaic.version = 11 : i64} {
  func.func @_ensemble_kernel(%arg0: i32, %arg1: memref<32x128xbf16, #tpu.memory_space<vmem>>, %arg2: memref<128x32xbf16, #tpu.memory_space<vmem>>, %arg3: memref<128x1xf32, #tpu.memory_space<vmem>>, %arg4: memref<4x128xf32, #tpu.memory_space<vmem>>, %arg5: memref<4x1xf32, #tpu.memory_space<vmem>>, %arg6: memref<1x128xf32, #tpu.memory_space<vmem>>, %arg7: memref<1x128xf32, #tpu.memory_space<vmem>>) attributes {dimension_semantics = [#tpu.dimension_semantics<parallel>], iteration_bounds = array<i64: 2>, scalar_prefetch = 0 : i64, scratch_operands = 0 : i64, tpu.core_type = #tpu.core_type<tc>, window_params = [{transform_indices = @transform_0, window_bounds = array<i64: 32, 128>}, {pipeline_mode = #tpu.pipeline_mode<synchronous>, transform_indices = @transform_1, window_bounds = array<i64: 128, 32>}, {pipeline_mode = #tpu.pipeline_mode<synchronous>, transform_indices = @transform_2, window_bounds = array<i64: 128, 1>}, {pipeline_mode = #tpu.pipeline_mode<synchronous>, transform_indices = @transform_3, window_bounds = array<i64: 4, 128>}, {pipeline_mode = #tpu.pipeline_mode<synchronous>, transform_indices = @transform_4, window_bounds = array<i64: 4, 1>}, {transform_indices = @transform_5, window_bounds = array<i64: 1, 128>}, {transform_indices = @transform_6, window_bounds = array<i64: 1, 128>}]} {
    %c0 = arith.constant 0 : index
    %c0_0 = arith.constant 0 : index
    %0 = vector.load %arg2[%c0, %c0_0] : memref<128x32xbf16, #tpu.memory_space<vmem>>, vector<128x32xbf16>
    %c0_1 = arith.constant 0 : index
    %c0_2 = arith.constant 0 : index
    %1 = vector.load %arg1[%c0_1, %c0_2] : memref<32x128xbf16, #tpu.memory_space<vmem>>, vector<32x128xbf16>
    %cst = arith.constant dense<0.000000e+00> : vector<128x128xf32>
    %2 = tpu.matmul %0, %1, %cst {dimension_numbers = #tpu.dot_dimension_numbers<[1], [0], [0], [1], [0, 0, 1, 1], [], []>} : vector<128x32xbf16>, vector<32x128xbf16>, vector<128x128xf32> -> vector<128x128xf32>
    %c0_3 = arith.constant 0 : index
    %c0_4 = arith.constant 0 : index
    %3 = vector.load %arg3[%c0_3, %c0_4] : memref<128x1xf32, #tpu.memory_space<vmem>>, vector<128x1xf32>
    %4 = vector.broadcast %3 : vector<128x1xf32> to vector<128x128xf32>
    %5 = arith.addf %2, %4 : vector<128x128xf32>
    %cst_5 = arith.constant 0.000000e+00 : f32
    %6 = vector.broadcast %cst_5 : f32 to vector<128x128xf32>
    %7 = arith.maximumf %5, %6 : vector<128x128xf32>
    %c0_6 = arith.constant 0 : index
    %c0_7 = arith.constant 0 : index
    %8 = vector.load %arg4[%c0_6, %c0_7] : memref<4x128xf32, #tpu.memory_space<vmem>>, vector<4x128xf32>
    %cst_8 = arith.constant dense<0.000000e+00> : vector<4x128xf32>
    %9 = tpu.matmul %8, %7, %cst_8 {dimension_numbers = #tpu.dot_dimension_numbers<[1], [0], [0], [1], [0, 0, 1, 1], [], []>} : vector<4x128xf32>, vector<128x128xf32>, vector<4x128xf32> -> vector<4x128xf32>
    %c0_9 = arith.constant 0 : index
    %c0_10 = arith.constant 0 : index
    %10 = vector.load %arg5[%c0_9, %c0_10] : memref<4x1xf32, #tpu.memory_space<vmem>>, vector<4x1xf32>
    %11 = vector.broadcast %10 : vector<4x1xf32> to vector<4x128xf32>
    %12 = arith.addf %9, %11 : vector<4x128xf32>
    %cst_11 = arith.constant dense<0.000000e+00> : vector<128xf32>
    %13 = vector.multi_reduction <add>, %12, %cst_11 [0] : vector<4x128xf32> to vector<128xf32>
    %14 = vector.shape_cast %13 : vector<128xf32> to vector<1x128xf32>
    %cst_12 = arith.constant 4.000000e+00 : f32
    %15 = vector.broadcast %cst_12 : f32 to vector<1x128xf32>
    %16 = arith.divf %14, %15 : vector<1x128xf32>
    %17 = vector.broadcast %16 : vector<1x128xf32> to vector<4x128xf32>
    %18 = arith.subf %12, %17 : vector<4x128xf32>
    %cst_13 = arith.constant 4.000000e+00 : f32
    %cst_14 = arith.constant 1.000000e+00 : f32
    %19 = arith.subf %cst_13, %cst_14 : f32
    %cst_15 = arith.constant 1.000000e+00 : f32
    %20 = arith.maximumf %19, %cst_15 : f32
    %21 = arith.mulf %18, %18 : vector<4x128xf32>
    %cst_16 = arith.constant dense<0.000000e+00> : vector<128xf32>
    %22 = vector.multi_reduction <add>, %21, %cst_16 [0] : vector<4x128xf32> to vector<128xf32>
    %23 = vector.shape_cast %22 : vector<128xf32> to vector<1x128xf32>
    %24 = vector.broadcast %20 : f32 to vector<1x128xf32>
    %25 = arith.divf %23, %24 : vector<1x128xf32>
    %c0_17 = arith.constant 0 : index
    %c0_18 = arith.constant 0 : index
    %26 = vector.load %arg6[%c0_17, %c0_18] : memref<1x128xf32, #tpu.memory_space<vmem>>, vector<1x128xf32>
    tpu.vector_store %arg6[%c0_17, %c0_18], %16 {strides = array<i32>} : memref<1x128xf32, #tpu.memory_space<vmem>>, vector<1x128xf32>,
    %c0_19 = arith.constant 0 : index
    %c0_20 = arith.constant 0 : index
    %27 = vector.load %arg7[%c0_19, %c0_20] : memref<1x128xf32, #tpu.memory_space<vmem>>, vector<1x128xf32>
    tpu.vector_store %arg7[%c0_19, %c0_20], %25 {strides = array<i32>} : memref<1x128xf32, #tpu.memory_space<vmem>>, vector<1x128xf32>,
    return
  }
  func.func @transform_0(%arg0: i32) -> (i32, i32) {
    %c0_i32 = arith.constant 0 : i32
    %c0_i32_0 = arith.constant 0 : i32
    return %c0_i32, %arg0 : i32, i32
  }
  func.func @transform_1(%arg0: i32) -> (i32, i32) {
    %c0_i32 = arith.constant 0 : i32
    %c0_i32_0 = arith.constant 0 : i32
    %c0_i32_1 = arith.constant 0 : i32
    return %c0_i32, %c0_i32_0 : i32, i32
  }
  func.func @transform_2(%arg0: i32) -> (i32, i32) {
    %c0_i32 = arith.constant 0 : i32
    %c0_i32_0 = arith.constant 0 : i32
    %c0_i32_1 = arith.constant 0 : i32
    return %c0_i32, %c0_i32_0 : i32, i32
  }
  func.func @transform_3(%arg0: i32) -> (i32, i32) {
    %c0_i32 = arith.constant 0 : i32
    %c0_i32_0 = arith.constant 0 : i32
    %c0_i32_1 = arith.constant 0 : i32
    return %c0_i32, %c0_i32_0 : i32, i32
  }
  func.func @transform_4(%arg0: i32) -> (i32, i32) {
    %c0_i32 = arith.constant 0 : i32
    %c0_i32_0 = arith.constant 0 : i32
    %c0_i32_1 = arith.constant 0 : i32
    return %c0_i32, %c0_i32_0 : i32, i32
  }
  func.func @transform_5(%arg0: i32) -> (i32, i32) {
    %c0_i32 = arith.constant 0 : i32
    %c0_i32_0 = arith.constant 0 : i32
    return %c0_i32, %arg0 : i32, i32
  }
  func.func @transform_6(%arg0: i32) -> (i32, i32) {
    %c0_i32 = arith.constant 0 : i32
    %c0_i32_0 = arith.constant 0 : i32
    return %c0_i32, %arg0 : i32, i32
  }
}

</mosaic_0001>

<llo_original>
// kernel: tpu_custom_call.1
$region0: #{tpu_custom_call.1}
  #allocation0 [shape = 'u32[]', space=smem, size = 0x4, offset = 0x4, fixed_abs, tag = 'smem constant byte address 0x4 - core index']
  #allocation1 [shape = 'u32[72,128]{1,0:T(1,128)}', space=vmem, size = 0x9000, scoped, tag = 'internal scratch']
  %s0 = inlined_call_operand.vmem [shape: bf16[32,256], index: 0, kind: input, shape index: {}]
  %s1 = inlined_call_operand.vmem [shape: bf16[128,32], index: 1, kind: input, shape index: {}]
  %s2 = inlined_call_operand.vmem [shape: f32[128,1], index: 2, kind: input, shape index: {}]
  %s3 = inlined_call_operand.vmem [shape: f32[4,128], index: 3, kind: input, shape index: {}]
  %s4 = inlined_call_operand.vmem [shape: f32[4,1], index: 4, kind: input, shape index: {}]
  %s5 = inlined_call_operand.hbm [shape: f32[1,256], index: 5, kind: output, shape index: {0}]
  %s6 = inlined_call_operand.hbm [shape: f32[1,256], index: 6, kind: output, shape index: {1}]
  %7 = xla_tuple %s5, %s6
  %s8 = sld [smem:[#allocation0]]
  $region102: #{tpu_custom_call.1} parent=0
    _
  %s10 = ssub.s32 1, %s8
  %s11 = scalar_select 0, %s10, %s8
  $region1: #{tpu_custom_call.1} parent=0
    #allocation2 [shape = 'u8[16384]{0}', space=vmem, size = 0x4000, scoped, tag = 'input window, operand 0']
    #allocation3 [shape = 'u8[1024]{0}', space=vmem, size = 0x400, scoped, tag = 'output window, operand 0']
    #allocation4 [shape = 's32[2]{0}', space=sflag, size = 0x8, scoped, tag = 'scoped memory for tpu_custom_call.1']
    #allocation5 [shape = 'u8[1024]{0}', space=vmem, size = 0x400, scoped, tag = 'output window, operand 1']
    #allocation6 [shape = 's32[2]{0}', space=sflag, size = 0x8, scoped, tag = 'scoped memory for tpu_custom_call.1']
    %12 = vsyncpa [#allocation4], 0
    %s13 = scalar_lea.sflag [#allocation4], 1
    %14 = vsyncpa %s13, 0
    %15 = vsyncpa [#allocation6], 0
    %s16 = scalar_lea.sflag [#allocation6], 1
    %17 = vsyncpa %s16, 0
    loop: start=0, step=1, limit=4
    $region2: #{tpu_custom_call.1} parent=1 // loop_pre_header
      _
    $region3: #{tpu_custom_call.1} parent=1 // loop_header
      %s19 = sphi 0, %s23
      %p20 = scmp.ge.s32.totalorder %s19, 4
      %s29 = sphi 0, %s31
      %s32 = sphi 0, %s29
      %s33 = sphi 0, %s32
      %s49 = sphi 0, %s33
      %s53 = sphi 0, %s53
      %s55 = sphi 0, %s53
      %s56 = sphi 0, %s55
      %s70 = sphi 0, %s56
      %s74 = sphi 0, %s74
      %s76 = sphi 0, %s74
      %s77 = sphi 0, %s76
      %s91 = sphi 0, %s77
      %s95 = sphi 0, %s95
      %s97 = sphi 0, %s95
      %s98 = sphi 0, %s97
      %s112 = sphi 0, %s98
      %s116 = sphi 0, %s116
      %s118 = sphi 0, %s116
      %s119 = sphi 0, %s118
      %s133 = sphi 0, %s119
      %s139 = sphi 0, %s141
      %s142 = sphi 0, %s139
      %s143 = sphi 0, %s142
      %s159 = sphi 0, %s143
      %s165 = sphi 0, %s167
      %s168 = sphi 0, %s165
      %s169 = sphi 0, %s168
      %s185 = sphi 0, %s169
    $region4: #{tpu_custom_call.1} parent=1 // loop_header_branch
      %22 = sbr.rel (%p20) target = $region8
    $region5: #{tpu_custom_call.1} parent=1 // loop_body
      %s24 = ssub.s32 %s19, 1
      %s25 = ssub.s32 %s19, 2
      %s26 = sadd.s32 %s19, 1
      %s27 = ssub.s32 %s19, %s26
      %p28 = scmp.eq.s32.totalorder %s27, 0
      %s30 = sadd.s32 %s29, 1
      %s31 = scalar_select %p28, %s29, %s30
      %p34 = pneg %p28
      %p35 = scmp.eq.s32.totalorder %s19, 1
      %p36 = por %p34, %p35
      %p37 = scmp.ne.s32.totalorder %s29, %s32
      %p38 = scmp.eq.s32.totalorder %s19, 0
      %p39 = por %p37, %p38
      %p40 = scmp.ne.s32.totalorder %s29, %s32
      %p41 = scmp.eq.s32.totalorder %s24, 1
      %p42 = por %p40, %p41
      %p43 = scmp.ne.s32.totalorder %s32, %s33
      %p44 = scmp.eq.s32.totalorder %s24, 0
      %p45 = por %p43, %p44
      %p46 = scmp.ne.s32.totalorder %s32, %s33
      %p47 = scmp.eq.s32.totalorder %s25, 1
      %p48 = por %p46, %p47
      %p50 = scmp.ne.s32.totalorder %s33, %s49
      %p51 = scmp.eq.s32.totalorder %s25, 0
      %p52 = por %p50, %p51
      %s54 = sadd.s32 %s53, 1
      %p57 = scmp.eq.s32.totalorder %s19, 1
      %p58 = scmp.ne.s32.totalorder %s53, %s55
      %p59 = scmp.eq.s32.totalorder %s19, 0
      %p60 = por %p58, %p59
      %p61 = scmp.ne.s32.totalorder %s53, %s55
      %p62 = scmp.eq.s32.totalorder %s24, 1
      %p63 = por %p61, %p62
      %p64 = scmp.ne.s32.totalorder %s55, %s56
      %p65 = scmp.eq.s32.totalorder %s24, 0
      %p66 = por %p64, %p65
      %p67 = scmp.ne.s32.totalorder %s55, %s56
      %p68 = scmp.eq.s32.totalorder %s25, 1
      %p69 = por %p67, %p68
      %p71 = scmp.ne.s32.totalorder %s56, %s70
      %p72 = scmp.eq.s32.totalorder %s25, 0
      %p73 = por %p71, %p72
      %s75 = sadd.s32 %s74, 1
      %p78 = scmp.eq.s32.totalorder %s19, 1
      %p79 = scmp.ne.s32.totalorder %s74, %s76
      %p80 = scmp.eq.s32.totalorder %s19, 0
      %p81 = por %p79, %p80
      %p82 = scmp.ne.s32.totalorder %s74, %s76
      %p83 = scmp.eq.s32.totalorder %s24, 1
      %p84 = por %p82, %p83
      %p85 = scmp.ne.s32.totalorder %s76, %s77
      %p86 = scmp.eq.s32.totalorder %s24, 0
      %p87 = por %p85, %p86
      %p88 = scmp.ne.s32.totalorder %s76, %s77
      %p89 = scmp.eq.s32.totalorder %s25, 1
      %p90 = por %p88, %p89
      %p92 = scmp.ne.s32.totalorder %s77, %s91
      %p93 = scmp.eq.s32.totalorder %s25, 0
      %p94 = por %p92, %p93
      %s96 = sadd.s32 %s95, 1
      %p99 = scmp.eq.s32.totalorder %s19, 1
      %p100 = scmp.ne.s32.totalorder %s95, %s97
      %p101 = scmp.eq.s32.totalorder %s19, 0
      %p102 = por %p100, %p101
      %p103 = scmp.ne.s32.totalorder %s95, %s97
      %p104 = scmp.eq.s32.totalorder %s24, 1
      %p105 = por %p103, %p104
      %p106 = scmp.ne.s32.totalorder %s97, %s98
      %p107 = scmp.eq.s32.totalorder %s24, 0
      %p108 = por %p106, %p107
      %p109 = scmp.ne.s32.totalorder %s97, %s98
      %p110 = scmp.eq.s32.totalorder %s25, 1
      %p111 = por %p109, %p110
      %p113 = scmp.ne.s32.totalorder %s98, %s112
      %p114 = scmp.eq.s32.totalorder %s25, 0
      %p115 = por %p113, %p114
      %s117 = sadd.s32 %s116, 1
      %p120 = scmp.eq.s32.totalorder %s19, 1
      %p121 = scmp.ne.s32.totalorder %s116, %s118
      %p122 = scmp.eq.s32.totalorder %s19, 0
      %p123 = por %p121, %p122
      %p124 = scmp.ne.s32.totalorder %s116, %s118
      %p125 = scmp.eq.s32.totalorder %s24, 1
      %p126 = por %p124, %p125
      %p127 = scmp.ne.s32.totalorder %s118, %s119
      %p128 = scmp.eq.s32.totalorder %s24, 0
      %p129 = por %p127, %p128
      %p130 = scmp.ne.s32.totalorder %s118, %s119
      %p131 = scmp.eq.s32.totalorder %s25, 1
      %p132 = por %p130, %p131
      %p134 = scmp.ne.s32.totalorder %s119, %s133
      %p135 = scmp.eq.s32.totalorder %s25, 0
      %p136 = por %p134, %p135
      %s137 = ssub.s32 %s19, %s26
      %p138 = scmp.eq.s32.totalorder %s137, 0
      %s140 = sadd.s32 %s139, 1
      %s141 = scalar_select %p138, %s139, %s140
      %p144 = pneg %p138
      %p145 = scmp.eq.s32.totalorder %s19, 1
      %p146 = por %p144, %p145
      %p147 = scmp.ne.s32.totalorder %s139, %s142
      %p148 = scmp.eq.s32.totalorder %s19, 0
      %p149 = por %p147, %p148
      %p150 = scmp.ne.s32.totalorder %s139, %s142
      %p151 = scmp.eq.s32.totalorder %s24, 1
      %p152 = por %p150, %p151
      %p153 = scmp.ne.s32.totalorder %s142, %s143
      %p154 = scmp.eq.s32.totalorder %s24, 0
      %p155 = por %p153, %p154
      %p156 = scmp.ne.s32.totalorder %s142, %s143
      %p157 = scmp.eq.s32.totalorder %s25, 1
      %p158 = por %p156, %p157
      %p160 = scmp.ne.s32.totalorder %s143, %s159
      %p161 = scmp.eq.s32.totalorder %s25, 0
      %p162 = por %p160, %p161
      %s163 = ssub.s32 %s19, %s26
      %p164 = scmp.eq.s32.totalorder %s163, 0
      %s166 = sadd.s32 %s165, 1
      %s167 = scalar_select %p164, %s165, %s166
      %p170 = pneg %p164
      %p171 = scmp.eq.s32.totalorder %s19, 1
      %p172 = por %p170, %p171
      %p173 = scmp.ne.s32.totalorder %s165, %s168
      %p174 = scmp.eq.s32.totalorder %s19, 0
      %p175 = por %p173, %p174
      %p176 = scmp.ne.s32.totalorder %s165, %s168
      %p177 = scmp.eq.s32.totalorder %s24, 1
      %p178 = por %p176, %p177
      %p179 = scmp.ne.s32.totalorder %s168, %s169
      %p180 = scmp.eq.s32.totalorder %s24, 0
      %p181 = por %p179, %p180
      %p182 = scmp.ne.s32.totalorder %s168, %s169
      %p183 = scmp.eq.s32.totalorder %s25, 1
      %p184 = por %p182, %p183
      %p186 = scmp.ne.s32.totalorder %s169, %s185
      %p187 = scmp.eq.s32.totalorder %s25, 0
      %p188 = por %p186, %p187
      %p189 = scmp.le.s32.totalorder 1, %s19
      %p190 = scmp.lt.s32.totalorder %s19, 3
      %p191 = pnand %p189, %p190
      %p192 = pneg %p191
      // Predicated region
      $region9: #{tpu_custom_call.1} parent=5 // pred_check
        _
      $region10: #{tpu_custom_call.1} parent=5 // pred_check_branch
        %194 = sbr.rel (%p191) target = $region12
      $region11: #{tpu_custom_call.1} parent=5 // pred_region
        %s195 = ssub.s32 %s19, 1
        // Predicated region
        $region13: #{tpu_custom_call.1} parent=11 // pred_check
          %p196 = pneg %p66
        $region14: #{tpu_custom_call.1} parent=11 // pred_check_branch
          %198 = sbr.rel (%p196) target = $region16
        $region15: #{tpu_custom_call.1} parent=11 // pred_region
          _
        $region16: #{tpu_custom_call.1} parent=11 // pred_fallthru
          _
        // Predicated region
        $region17: #{tpu_custom_call.1} parent=11 // pred_check
          %p199 = pneg %p87
        $region18: #{tpu_custom_call.1} parent=11 // pred_check_branch
          %201 = sbr.rel (%p199) target = $region20
        $region19: #{tpu_custom_call.1} parent=11 // pred_region
          _
        $region20: #{tpu_custom_call.1} parent=11 // pred_fallthru
          _
        // Predicated region
        $region21: #{tpu_custom_call.1} parent=11 // pred_check
          %p202 = pneg %p108
        $region22: #{tpu_custom_call.1} parent=11 // pred_check_branch
          %204 = sbr.rel (%p202) target = $region24
        $region23: #{tpu_custom_call.1} parent=11 // pred_region
          _
        $region24: #{tpu_custom_call.1} parent=11 // pred_fallthru
          _
        // Predicated region
        $region25: #{tpu_custom_call.1} parent=11 // pred_check
          %p205 = pneg %p129
        $region26: #{tpu_custom_call.1} parent=11 // pred_check_branch
          %207 = sbr.rel (%p205) target = $region28
        $region27: #{tpu_custom_call.1} parent=11 // pred_region
          _
        $region28: #{tpu_custom_call.1} parent=11 // pred_fallthru
          _
      $region12: #{tpu_custom_call.1} parent=5 // pred_fallthru
        _
      %p208 = scmp.lt.s32.totalorder %s19, 2
      // Predicated region
      $region29: #{tpu_custom_call.1} parent=5 // pred_check
        %p209 = pneg %p208
      $region30: #{tpu_custom_call.1} parent=5 // pred_check_branch
        %211 = sbr.rel (%p209) target = $region32
      $region31: #{tpu_custom_call.1} parent=5 // pred_region
        // Predicated region
        $region33: #{tpu_custom_call.1} parent=31 // pred_check
          %p212 = pneg %p39
        $region34: #{tpu_custom_call.1} parent=31 // pred_check_branch
          %214 = sbr.rel (%p212) target = $region36
        $region35: #{tpu_custom_call.1} parent=31 // pred_region
          %s215 = sand.u32 %s29, 1
          %s216 = sand.u32 %s29, 1
          %s217 = smul.addr %s216, 16
          %s218 = scalar_lea.vmem [#allocation2], %s217
          %s219 = smul.addr %s19, 4
          %s220 = scalar_lea.vmem %s0, %s219
          // Predicated region
          $region37: #{tpu_custom_call.1} parent=35 // pred_check
            _
          $region38: #{tpu_custom_call.1} parent=35 // pred_check_branch
            %222 = sbr.rel (0) target = $region40
          $region39: #{tpu_custom_call.1} parent=35 // pred_region
            // Predicated region
            $region41: #{tpu_custom_call.1} parent=39 // pred_check
              _
            $region42: #{tpu_custom_call.1} parent=39 // pred_check_branch
              %224 = sbr.rel target = $region44
            $region43: #{tpu_custom_call.1} parent=39 // pred_region
              // Predicated region
              $region56: #{tpu_custom_call.1} parent=43 // pred_check
                _
              $region57: #{tpu_custom_call.1} parent=43 // pred_check_branch
                %246 = sbr.rel (0) target = $region59
              $region58: #{tpu_custom_call.1} parent=43 // pred_region
                loop: start=0, step=1, limit=1
                $region60: #{tpu_custom_call.1} parent=58 // loop_pre_header
                  _
                $region61: #{tpu_custom_call.1} parent=58 // loop_header
                  %s248 = sphi 0, %s252
                  %p249 = scmp.ge.s32.totalorder %s248, 1
                  %s253 = sphi %s220, %s220
                  %s254 = sphi %s218, %s218
                $region62: #{tpu_custom_call.1} parent=58 // loop_header_branch
                  %251 = sbr.rel (%p249) target = $region66
                $region63: #{tpu_custom_call.1} parent=58 // loop_body
                  _
                $region64: #{tpu_custom_call.1} parent=58 // loop_footer
                  %s252 = sadd.s32 1, %s248
                $region65: #{tpu_custom_call.1} parent=58 // loop_footer_branch
                  %247 = sbr.rel target = $region61
                $region66: #{tpu_custom_call.1} parent=58 // loop_exit
                  _
                %s256 = ssub.s32 16, 1
                loop: start=0, step=1, limit=1
                $region67: #{tpu_custom_call.1} parent=58 // loop_pre_header
                  _
                $region68: #{tpu_custom_call.1} parent=58 // loop_header
                  %s258 = sphi 0, %s262
                  %p259 = scmp.ge.s32.totalorder %s258, 1
                  %s263 = sphi %s220, %s220
                  %s264 = sphi %s218, %s218
                $region69: #{tpu_custom_call.1} parent=58 // loop_header_branch
                  %261 = sbr.rel (%p259) target = $region73
                $region70: #{tpu_custom_call.1} parent=58 // loop_body
                  %v265 = vld [vmem:[%s263] sm:%s256]
                  %266 = vst [vmem:[%s264] sm:%s256] %v265
                  %v267 = vld [vmem:[%s263 + $0x8] sm:%s256]
                  %268 = vst [vmem:[%s264 + $0x4] sm:%s256] %v267
                  %v269 = vld [vmem:[%s263 + $0x10] sm:%s256]
                  %270 = vst [vmem:[%s264 + $0x8] sm:%s256] %v269
                  %v271 = vld [vmem:[%s263 + $0x18] sm:%s256]
                  %272 = vst [vmem:[%s264 + $0xc] sm:%s256] %v271
                $region71: #{tpu_custom_call.1} parent=58 // loop_footer
                  %s262 = sadd.s32 1, %s258
                $region72: #{tpu_custom_call.1} parent=58 // loop_footer_branch
                  %257 = sbr.rel target = $region68
                $region73: #{tpu_custom_call.1} parent=58 // loop_exit
                  _
              $region59: #{tpu_custom_call.1} parent=43 // pred_fallthru
                _
            $region44: #{tpu_custom_call.1} parent=39 // pred_fallthru
              _
            // Predicated region
            $region45: #{tpu_custom_call.1} parent=39 // pred_check
              _
            $region46: #{tpu_custom_call.1} parent=39 // pred_check_branch
              %226 = sbr.rel (0) target = $region48
            $region47: #{tpu_custom_call.1} parent=39 // pred_region
              %s228 = ssub.s32 16, 1
              loop: start=0, step=1, limit=1
              $region49: #{tpu_custom_call.1} parent=47 // loop_pre_header
                _
              $region50: #{tpu_custom_call.1} parent=47 // loop_header
                %s230 = sphi 0, %s234
                %p231 = scmp.ge.s32.totalorder %s230, 1
                %s235 = sphi %s220, %s220
                %s236 = sphi %s218, %s218
              $region51: #{tpu_custom_call.1} parent=47 // loop_header_branch
                %233 = sbr.rel (%p231) target = $region55
              $region52: #{tpu_custom_call.1} parent=47 // loop_body
                %v237 = vld [vmem:[%s235] sm:%s228]
                %238 = vst [vmem:[%s236] sm:%s228] %v237
                %v239 = vld [vmem:[%s235 + $0x8] sm:%s228]
                %240 = vst [vmem:[%s236 + $0x4] sm:%s228] %v239
                %v241 = vld [vmem:[%s235 + $0x10] sm:%s228]
                %242 = vst [vmem:[%s236 + $0x8] sm:%s228] %v241
                %v243 = vld [vmem:[%s235 + $0x18] sm:%s228]
                %244 = vst [vmem:[%s236 + $0xc] sm:%s228] %v243
              $region53: #{tpu_custom_call.1} parent=47 // loop_footer
                %s234 = sadd.s32 1, %s230
              $region54: #{tpu_custom_call.1} parent=47 // loop_footer_branch
                %229 = sbr.rel target = $region50
              $region55: #{tpu_custom_call.1} parent=47 // loop_exit
                _
            $region48: #{tpu_custom_call.1} parent=39 // pred_fallthru
              _
          $region40: #{tpu_custom_call.1} parent=35 // pred_fallthru
            _
          %273 = vnop
        $region36: #{tpu_custom_call.1} parent=31 // pred_fallthru
          _
      $region32: #{tpu_custom_call.1} parent=5 // pred_fallthru
        _
      %p274 = scmp.le.s32.totalorder 1, %s19
      %p275 = scmp.lt.s32.totalorder %s19, 3
      %p276 = pnand %p274, %p275
      %p277 = pneg %p276
      // Predicated region
      $region74: #{tpu_custom_call.1} parent=5 // pred_check
        _
      $region75: #{tpu_custom_call.1} parent=5 // pred_check_branch
        %279 = sbr.rel (%p276) target = $region77
      $region76: #{tpu_custom_call.1} parent=5 // pred_region
        %s280 = ssub.s32 %s19, 1
        %s281 = sand.u32 %s32, 1
        %s282 = sand.u32 %s32, 1
        %s283 = smul.addr %s282, 16
        %s284 = scalar_lea.vmem [#allocation2], %s283
        // Predicated region
        $region78: #{tpu_custom_call.1} parent=76 // pred_check
          %p285 = pneg %p45
        $region79: #{tpu_custom_call.1} parent=76 // pred_check_branch
          %287 = sbr.rel (%p285) target = $region81
        $region80: #{tpu_custom_call.1} parent=76 // pred_region
          _
        $region81: #{tpu_custom_call.1} parent=76 // pred_fallthru
          _
        %s288 = sand.u32 %s32, 1
        %s289 = sand.u32 %s32, 1
        %s290 = smul.addr %s289, 16
        %s291 = scalar_lea.vmem [#allocation2], %s290
        %p292 = pneg %p45
        %p293 = pneg %p42
        %p294 = pneg %p66
        %p295 = pneg %p63
        %p296 = pneg %p87
        %p297 = pneg %p84
        %p298 = pneg %p108
        %p299 = pneg %p105
        %p300 = pneg %p129
        %p301 = pneg %p126
        %p302 = pneg %p155
        %p303 = pneg %p152
        %s304 = sand.u32 %s142, 1
        %s305 = scalar_lea.sflag [#allocation4], %s304
        %s306 = sand.u32 %s142, 1
        %s307 = scalar_lea.vmem [#allocation3], %s306
        %p308 = pneg %p181
        %p309 = pneg %p178
        %s310 = sand.u32 %s168, 1
        %s311 = scalar_lea.sflag [#allocation6], %s310
        %s312 = sand.u32 %s168, 1
        %s313 = scalar_lea.vmem [#allocation5], %s312
        %v315 = vld [vmem:[%s1] sm:$0xf]
        %v316 = vld [vmem:[%s1 + $0x4] sm:$0xf]
        %v317 = vld [vmem:[%s1 + $0x8] sm:$0xf]
        %v318 = vld [vmem:[%s1 + $0xc] sm:$0xf]
        %v319 = vld [vmem:[%s1 + $0x10] sm:$0xf]
        %v320 = vld [vmem:[%s1 + $0x14] sm:$0xf]
        %v321 = vld [vmem:[%s1 + $0x18] sm:$0xf]
        %v322 = vld [vmem:[%s1 + $0x1c] sm:$0xf]
        %v323 = vld [vmem:[%s1 + $0x20] sm:$0xf]
        %v324 = vld [vmem:[%s1 + $0x24] sm:$0xf]
        %v325 = vld [vmem:[%s1 + $0x28] sm:$0xf]
        %v326 = vld [vmem:[%s1 + $0x2c] sm:$0xf]
        %v327 = vld [vmem:[%s1 + $0x30] sm:$0xf]
        %v328 = vld [vmem:[%s1 + $0x34] sm:$0xf]
        %v329 = vld [vmem:[%s1 + $0x38] sm:$0xf]
        %v330 = vld [vmem:[%s1 + $0x3c] sm:$0xf]
        %v331 = vld [vmem:[%s284] sm:$0xf]
        %v332 = vld [vmem:[%s284 + $0x4] sm:$0xf]
        %v333 = vld [vmem:[%s284 + $0x8] sm:$0xf]
        %v334 = vld [vmem:[%s284 + $0xc] sm:$0xf]
        %v335 = vld [vmem:[%s2] sm:$0xff]
        %v336 = vld [vmem:[%s2 + $0x8] sm:$0xff]
        %v337 = vld [vmem:[%s2 + $0x10] sm:$0xff]
        %v338 = vld [vmem:[%s2 + $0x18] sm:$0xff]
        %v339 = vld [vmem:[%s2 + $0x20] sm:$0xff]
        %v340 = vld [vmem:[%s2 + $0x28] sm:$0xff]
        %v341 = vld [vmem:[%s2 + $0x30] sm:$0xff]
        %v342 = vld [vmem:[%s2 + $0x38] sm:$0xff]
        %v343 = vld [vmem:[%s2 + $0x40] sm:$0xff]
        %v344 = vld [vmem:[%s2 + $0x48] sm:$0xff]
        %v345 = vld [vmem:[%s2 + $0x50] sm:$0xff]
        %v346 = vld [vmem:[%s2 + $0x58] sm:$0xff]
        %v347 = vld [vmem:[%s2 + $0x60] sm:$0xff]
        %v348 = vld [vmem:[%s2 + $0x68] sm:$0xff]
        %v349 = vld [vmem:[%s2 + $0x70] sm:$0xff]
        %v350 = vld [vmem:[%s2 + $0x78] sm:$0xff]
        %352 = vset.pattern.permute.xlu0 0
        %353 = vperm.xlu0 %352, %v335
        %v354 = vpop.permute.xlu0 %353
        %357 = vset.pattern.permute.xlu0 0
        %358 = vperm.xlu0 %357, %v336
        %v359 = vpop.permute.xlu0 %358
        %362 = vset.pattern.permute.xlu0 0
        %363 = vperm.xlu0 %362, %v337
        %v364 = vpop.permute.xlu0 %363
        %367 = vset.pattern.permute.xlu0 0
        %368 = vperm.xlu0 %367, %v338
        %v369 = vpop.permute.xlu0 %368
        %372 = vset.pattern.permute.xlu0 0
        %373 = vperm.xlu0 %372, %v339
        %v374 = vpop.permute.xlu0 %373
        %377 = vset.pattern.permute.xlu0 0
        %378 = vperm.xlu0 %377, %v340
        %v379 = vpop.permute.xlu0 %378
        %382 = vset.pattern.permute.xlu0 0
        %383 = vperm.xlu0 %382, %v341
        %v384 = vpop.permute.xlu0 %383
        %387 = vset.pattern.permute.xlu0 0
        %388 = vperm.xlu0 %387, %v342
        %v389 = vpop.permute.xlu0 %388
        %392 = vset.pattern.permute.xlu0 0
        %393 = vperm.xlu0 %392, %v343
        %v394 = vpop.permute.xlu0 %393
        %397 = vset.pattern.permute.xlu0 0
        %398 = vperm.xlu0 %397, %v344
        %v399 = vpop.permute.xlu0 %398
        %402 = vset.pattern.permute.xlu0 0
        %403 = vperm.xlu0 %402, %v345
        %v404 = vpop.permute.xlu0 %403
        %407 = vset.pattern.permute.xlu0 0
        %408 = vperm.xlu0 %407, %v346
        %v409 = vpop.permute.xlu0 %408
        %412 = vset.pattern.permute.xlu0 0
        %413 = vperm.xlu0 %412, %v347
        %v414 = vpop.permute.xlu0 %413
        %417 = vset.pattern.permute.xlu0 0
        %418 = vperm.xlu0 %417, %v348
        %v419 = vpop.permute.xlu0 %418
        %422 = vset.pattern.permute.xlu0 0
        %423 = vperm.xlu0 %422, %v349
        %v424 = vpop.permute.xlu0 %423
        %427 = vset.pattern.permute.xlu0 0
        %428 = vperm.xlu0 %427, %v350
        %v429 = vpop.permute.xlu0 %428
        %v447 = vunpack.c.l.b16 %v315
        %v448 = vunpack.c.l.b16 %v316
        %v449 = vunpack.c.l.b16 %v317
        %v450 = vunpack.c.l.b16 %v318
        %v451 = vunpack.c.l.b16 %v319
        %v452 = vunpack.c.l.b16 %v320
        %v453 = vunpack.c.l.b16 %v321
        %v454 = vunpack.c.l.b16 %v322
        %v455 = vunpack.c.l.b16 %v323
        %v456 = vunpack.c.l.b16 %v324
        %v457 = vunpack.c.l.b16 %v325
        %v458 = vunpack.c.l.b16 %v326
        %v459 = vunpack.c.l.b16 %v327
        %v460 = vunpack.c.l.b16 %v328
        %v461 = vunpack.c.l.b16 %v329
        %v462 = vunpack.c.l.b16 %v330
        %v463 = vpack.c.b16 %v448, %v447
        %v464 = vpack.c.b16 %v450, %v449
        %v465 = vpack.c.b16 %v452, %v451
        %v466 = vpack.c.b16 %v454, %v453
        %v467 = vpack.c.b16 %v456, %v455
        %v468 = vpack.c.b16 %v458, %v457
        %v469 = vpack.c.b16 %v460, %v459
        %v470 = vpack.c.b16 %v462, %v461
        %v475 = vunpack.c.l.b16 %v331
        %v476 = vunpack.c.l.b16 %v332
        %v477 = vunpack.c.l.b16 %v333
        %v478 = vunpack.c.l.b16 %v334
        %v479 = vpack.c.b16 %v476, %v475
        %v480 = vpack.c.b16 %v478, %v477
        %vm483 = vcmask 261120
        %v485 = vsel %vm483, %v463, 0
        %v488 = vsel %vm483, %v464, 0
        %v491 = vsel %vm483, %v465, 0
        %v494 = vsel %vm483, %v466, 0
        %v497 = vsel %vm483, %v467, 0
        %v500 = vsel %vm483, %v468, 0
        %v503 = vsel %vm483, %v469, 0
        %v506 = vsel %vm483, %v470, 0
        %508 = vmatpush.bf16.msra.mxu0 0
        %509 = vmatpush.bf16.msra.mxu0 0
        %510 = vmatpush.bf16.msra.mxu0 0
        %511 = vmatpush.bf16.msra.mxu0 0
        %512 = vmatpush.bf16.msra.mxu0 0
        %513 = vmatpush.bf16.msra.mxu0 0
        %514 = vmatpush.bf16.msra.mxu0 %v480
        %515 = vmatpush.bf16.msra.mxu0 %v479
        %516 = vmatmul.bf16.gmra.mxu0 %v485
        %v517 = vpop.f32.mrf.mxu0
        %v518 = vadd.f32 %v354, %v517
        %v519 = vpop.f32.mrf.mxu0
        %v520 = vadd.f32 %v359, %v519
        %521 = vmatmul.bf16.gmra.mxu0 %v488
        %v522 = vpop.f32.mrf.mxu0
        %v523 = vadd.f32 %v364, %v522
        %v524 = vpop.f32.mrf.mxu0
        %v525 = vadd.f32 %v369, %v524
        %526 = vmatmul.bf16.gmra.mxu0 %v491
        %v527 = vpop.f32.mrf.mxu0
        %v528 = vadd.f32 %v374, %v527
        %v529 = vpop.f32.mrf.mxu0
        %v530 = vadd.f32 %v379, %v529
        %531 = vmatmul.bf16.gmra.mxu0 %v494
        %v532 = vpop.f32.mrf.mxu0
        %v533 = vadd.f32 %v384, %v532
        %v534 = vpop.f32.mrf.mxu0
        %v535 = vadd.f32 %v389, %v534
        %536 = vmatmul.bf16.gmra.mxu0 %v497
        %v537 = vpop.f32.mrf.mxu0
        %v538 = vadd.f32 %v394, %v537
        %v539 = vpop.f32.mrf.mxu0
        %v540 = vadd.f32 %v399, %v539
        %541 = vmatmul.bf16.gmra.mxu0 %v500
        %v542 = vpop.f32.mrf.mxu0
        %v543 = vadd.f32 %v404, %v542
        %v544 = vpop.f32.mrf.mxu0
        %v545 = vadd.f32 %v409, %v544
        %546 = vmatmul.bf16.gmra.mxu0 %v503
        %v547 = vpop.f32.mrf.mxu0
        %v548 = vadd.f32 %v414, %v547
        %v549 = vpop.f32.mrf.mxu0
        %v550 = vadd.f32 %v419, %v549
        %551 = vmatmul.bf16.gmra.mxu0 %v506
        %v552 = vpop.f32.mrf.mxu0
        %v553 = vadd.f32 %v424, %v552
        %v554 = vpop.f32.mrf.mxu0
        %v555 = vadd.f32 %v429, %v554
        %556 = vdwg.mxu0
        %v557 = vmax.f32 %v518, 0.0
        %v558 = vmax.f32 %v520, 0.0
        %v559 = vmax.f32 %v523, 0.0
        %v560 = vmax.f32 %v525, 0.0
        %v561 = vmax.f32 %v528, 0.0
        %v562 = vmax.f32 %v530, 0.0
        %v563 = vmax.f32 %v533, 0.0
        %v564 = vmax.f32 %v535, 0.0
        %v565 = vmax.f32 %v538, 0.0
        %v566 = vmax.f32 %v540, 0.0
        %v567 = vmax.f32 %v543, 0.0
        %v568 = vmax.f32 %v545, 0.0
        %v569 = vmax.f32 %v548, 0.0
        %v570 = vmax.f32 %v550, 0.0
        %v571 = vmax.f32 %v553, 0.0
        %v572 = vmax.f32 %v555, 0.0
        %v573 = vld [vmem:[%s3] sm:$0xf]
        %v574 = vld [vmem:[%s4] sm:$0xf]
        %576 = vset.pattern.permute.xlu0 0
        %577 = vperm.xlu0 %576, %v574
        %v578 = vpop.permute.xlu0 %577
        %580 = vmatpush.msra.mxu0 %v572
        %581 = vmatpush.msra.mxu0 %v571
        %582 = vmatpush.msra.mxu0 %v570
        %583 = vmatpush.msra.mxu0 %v569
        %584 = vmatpush.msra.mxu0 %v568
        %585 = vmatpush.msra.mxu0 %v567
        %586 = vmatpush.msra.mxu0 %v566
        %587 = vmatpush.msra.mxu0 %v565
        %588 = vmatpush.msra.mxu0 %v564
        %589 = vmatpush.msra.mxu0 %v563
        %590 = vmatpush.msra.mxu0 %v562
        %591 = vmatpush.msra.mxu0 %v561
        %592 = vmatpush.msra.mxu0 %v560
        %593 = vmatpush.msra.mxu0 %v559
        %594 = vmatpush.msra.mxu0 %v558
        %595 = vmatpush.msra.mxu0 %v557
        %596 = vmatmul.f32.gmra.mxu0 %v573
        %v597 = vpop.f32.mrf.mxu0
        %v598 = vadd.f32 %v578, %v597
        %599 = vdwg.mxu0
        %vm600 = vcmask 1043456
        %v601 = vsel %vm600, %v598, 0.0
        %v602 = vrot.slane %v601, 4
        %v603 = vadd.f32 %v601, %v602
        %v604 = vrot.slane %v603, 2
        %v605 = vadd.f32 %v603, %v604
        %v606 = vrot.slane %v605, 1
        %v607 = vadd.f32 %v605, %v606
        %v608 = vrcp.pop 4.0
        %v609 = vmul.f32 4.0, %v608
        %v610 = vsub.f32 1.0, %v609
        %v611 = vmul.f32 %v608, %v610
        %v612 = vadd.f32 %v608, %v611
        %vm613 = vweird.f32 %v608
        %v614 = vsel %vm613, %v608, %v612
        %v615 = vmul.f32 %v607, %v614
        %v616 = vsub.f32 %v598, %v615
        %v617 = vmul.f32 %v616, %v616
        %v618 = vsel %vm600, %v617, 0.0
        %v619 = vrot.slane %v618, 4
        %v620 = vadd.f32 %v618, %v619
        %v621 = vrot.slane %v620, 2
        %v622 = vadd.f32 %v620, %v621
        %v623 = vrot.slane %v622, 1
        %v624 = vadd.f32 %v622, %v623
        %v625 = vrcp.pop 3.0
        %v626 = vmul.f32 3.0, %v625
        %v627 = vsub.f32 1.0, %v626
        %v628 = vmul.f32 %v625, %v627
        %v629 = vadd.f32 %v625, %v628
        %vm630 = vweird.f32 %v625
        %v631 = vsel %vm630, %v625, %v629
        %v632 = vmul.f32 %v624, %v631
        %633 = vst [vmem:[%s307] sm:$0x1] %v615
        %634 = vst [vmem:[%s313] sm:$0x1] %v632
        %s635 = sand.u32 %s142, 1
        %s636 = scalar_lea.sflag [#allocation4], %s635
        %s637 = sand.u32 %s142, 1
        %s638 = scalar_lea.vmem [#allocation3], %s637
        %s639 = sand.u32 %s168, 1
        %s640 = scalar_lea.sflag [#allocation6], %s639
        %s641 = sand.u32 %s168, 1
        %s642 = scalar_lea.vmem [#allocation5], %s641
        // Predicated region
        $region82: #{tpu_custom_call.1} parent=76 // pred_check
          %p643 = pneg %p152
        $region83: #{tpu_custom_call.1} parent=76 // pred_check_branch
          %645 = sbr.rel (%p643) target = $region85
        $region84: #{tpu_custom_call.1} parent=76 // pred_region
          %647 = vsyncadd %s636, 0
          %s648 = scalar_lea.hbm %s5, %s24
          %s650 = sshll.u32 %s638, 4
          %s651 = int_to_ptr.vmem [resolvable:$true] %s650
          %s652 = sshll.u32 %s648, 4
          %s653 = int_to_ptr.hbm [resolvable:$true] %s652
          %655 = dma.vmem_to_hbm [thread:$0]  %s651, 16, %s653, %s636
        $region85: #{tpu_custom_call.1} parent=76 // pred_fallthru
          _
        // Predicated region
        $region86: #{tpu_custom_call.1} parent=76 // pred_check
          %p656 = pneg %p178
        $region87: #{tpu_custom_call.1} parent=76 // pred_check_branch
          %658 = sbr.rel (%p656) target = $region89
        $region88: #{tpu_custom_call.1} parent=76 // pred_region
          %660 = vsyncadd %s640, 0
          %s661 = scalar_lea.hbm %s6, %s24
          %s663 = sshll.u32 %s642, 4
          %s664 = int_to_ptr.vmem [resolvable:$true] %s663
          %s665 = sshll.u32 %s661, 4
          %s666 = int_to_ptr.hbm [resolvable:$true] %s665
          %668 = dma.vmem_to_hbm [thread:$0]  %s664, 16, %s666, %s640
        $region89: #{tpu_custom_call.1} parent=76 // pred_fallthru
          _
      $region77: #{tpu_custom_call.1} parent=5 // pred_fallthru
        _
      %p669 = scmp.le.s32.totalorder 2, %s19
      // Predicated region
      $region90: #{tpu_custom_call.1} parent=5 // pred_check
        %p670 = pneg %p669
      $region91: #{tpu_custom_call.1} parent=5 // pred_check_branch
        %672 = sbr.rel (%p670) target = $region93
      $region92: #{tpu_custom_call.1} parent=5 // pred_region
        %s673 = ssub.s32 %s19, 2
        // Predicated region
        $region94: #{tpu_custom_call.1} parent=92 // pred_check
          %p674 = pneg %p158
        $region95: #{tpu_custom_call.1} parent=92 // pred_check_branch
          %676 = sbr.rel (%p674) target = $region97
        $region96: #{tpu_custom_call.1} parent=92 // pred_region
          %s677 = sand.u32 %s143, 1
          %s678 = scalar_lea.sflag [#allocation4], %s677
          %s679 = sand.u32 %s143, 1
          %s680 = scalar_lea.vmem [#allocation3], %s679
          %682 = dma.done %s678, 16
        $region97: #{tpu_custom_call.1} parent=92 // pred_fallthru
          _
        // Predicated region
        $region98: #{tpu_custom_call.1} parent=92 // pred_check
          %p683 = pneg %p184
        $region99: #{tpu_custom_call.1} parent=92 // pred_check_branch
          %685 = sbr.rel (%p683) target = $region101
        $region100: #{tpu_custom_call.1} parent=92 // pred_region
          %s686 = sand.u32 %s169, 1
          %s687 = scalar_lea.sflag [#allocation6], %s686
          %s688 = sand.u32 %s169, 1
          %s689 = scalar_lea.vmem [#allocation5], %s688
          %691 = dma.done %s687, 16
        $region101: #{tpu_custom_call.1} parent=92 // pred_fallthru
          _
      $region93: #{tpu_custom_call.1} parent=5 // pred_fallthru
        _
    $region6: #{tpu_custom_call.1} parent=1 // loop_footer
      %s23 = sadd.s32 1, %s19
    $region7: #{tpu_custom_call.1} parent=1 // loop_footer_branch
      %18 = sbr.rel target = $region3
    $region8: #{tpu_custom_call.1} parent=1 // loop_exit
      _
    %692 = vsyncpa [#allocation4], 1
    %s693 = scalar_lea.sflag [#allocation4], 1
    %694 = vsyncpa %s693, 1
    %695 = vsyncpa [#allocation6], 1
    %s696 = scalar_lea.sflag [#allocation6], 1
    %697 = vsyncpa %s696, 1

</llo_original>
